<compile_context>
chip_gen: v5e
topology: v5e:2x2
jax: 0.10.0
libtpu: 0.0.40
codegen_flags: <defaults>
</compile_context>

<pallas_src>
from functools import partial

import jax
import jax.numpy as jnp
from jax.experimental import pallas as pl
from jax.experimental.pallas import tpu as pltpu

ELL_COEF = 1.0
BARRIER_COEF = 0.01


def _round_up(x, m):
    return ((x + m - 1) // m) * m


def _barrier_kernel(x_ref, w1t_ref, b1c_ref, w2t_ref, b2c_ref, w3c_ref,
                    c0_ref, out_ref):
    # x_ref: (TB, D) f32 states tile streamed straight from HBM.
    # Relayout once so the batch rides the lane axis; the XLU transpose hides
    # under the MXU pushes, every per-sample reduction becomes a cheap sublane
    # (axis=0) reduce, and the output block is a lane-dense (1, TB) row.
    xt = x_ref[...].T                                     # (D, TB) f32

    # layer 1: (H, D) @ (D, TB) -> (H, TB), f32 MXU matmul, f32 accumulation
    h1 = jnp.maximum(
        jnp.dot(w1t_ref[...], xt, preferred_element_type=jnp.float32)
        + b1c_ref[...], 0.0)
    # layer 2: (H, H) @ (H, TB) -> (H, TB)
    h2 = jnp.maximum(
        jnp.dot(w2t_ref[...], h1, preferred_element_type=jnp.float32)
        + b2c_ref[...], 0.0)

    # last layer (H -> 1): VPU multiply + sublane reduction.  b3 and the
    # hoisted net(s0) live in the SMEM scalar c0 = b3 - net(s0), so this row
    # is already net(x) - net(s0).
    net_minus_h0 = (jnp.sum(h2 * w3c_ref[...], axis=0, keepdims=True)
                    + c0_ref[0, 0])                       # (1, TB) f32

    # softplus (numerically stable) * ell_coef  +  ||x||^2 * barrier_coef - 1
    sp = jnp.logaddexp(net_minus_h0, 0.0)                 # (1, TB) f32
    env_b = jnp.sum(xt * xt, axis=0, keepdims=True)       # f32 states -> exact

    out_ref[...] = sp * ELL_COEF + env_b * BARRIER_COEF - 1.0


@partial(jax.jit, static_argnames=("block_rows",))
def barrier_forward(states, s0, params, *, block_rows=8192):
    """states: (B, D) float32, s0: (D,) float32, params: dict of MLP weights."""
    B, D = states.shape
    H = params["w1"].shape[1]

    # Batch tile: multiple of 128 (lane-dense output), big enough to amortize
    # per-grid-step overhead, but capped so the grid keeps >= 2 steps when the
    # batch allows it (v7x megacore sharding of the "parallel" axis).
    b_ceil = _round_up(B, 128)
    tb = max(128, min(block_rows, _round_up((b_ceil + 1) // 2, 128)))
    b_pad = _round_up(B, tb)

    # ---- one-time parameter prep (tiny, VMEM-resident in the kernel) ----
    f32 = jnp.float32
    hi = jax.lax.Precision.HIGHEST
    w1t = params["w1"].T.astype(f32)                      # (H, D)
    w2t = params["w2"].T.astype(f32)                      # (H, H)
    b1c = params["b1"].reshape(1, H).T.astype(f32)        # (H, 1)
    b2c = params["b2"].reshape(1, H).T.astype(f32)        # (H, 1)
    w3c = params["w3"].reshape(H, 1).astype(f32)          # (H, 1)
    b3 = params["b3"].reshape(1, 1).astype(f32)           # (1, 1)

    # ---- hoist net(s0): batch-independent, computed once outside the grid ----
    s0c = s0.reshape(D, 1).astype(f32)
    h1 = jnp.maximum(jnp.dot(w1t, s0c, precision=hi) + b1c, 0.0)
    h2 = jnp.maximum(jnp.dot(w2t, h1, precision=hi) + b2c, 0.0)
    h0 = jnp.sum(h2 * w3c, axis=0, keepdims=True) + b3    # net(s0), (1, 1)
    c0 = (b3 - h0).astype(f32)                            # SMEM scalar

    # ---- stream the raw f32 states; only pad the batch to a tile multiple ----
    x = states.astype(f32)
    if b_pad != B:
        x = jnp.pad(x, ((0, b_pad - B), (0, 0)))

    grid = (b_pad // tb,)
    cost = pl.CostEstimate(
        flops=2 * B * (D * H + H * H + H),
        transcendentals=2 * B,                             # exp + log in softplus
        bytes_accessed=4 * B * D + 4 * B + 4 * (D * H + H * H + 3 * H + 2),
    )

    out = pl.pallas_call(
        _barrier_kernel,
        out_shape=jax.ShapeDtypeStruct((1, b_pad), jnp.float32),
        grid=grid,
        in_specs=[
            pl.BlockSpec((tb, D), lambda i: (i, 0)),      # states tile (streamed)
            pl.BlockSpec((H, D), lambda i: (0, 0)),       # w1^T   (resident)
            pl.BlockSpec((H, 1), lambda i: (0, 0)),       # b1     (resident)
            pl.BlockSpec((H, H), lambda i: (0, 0)),       # w2^T   (resident)
            pl.BlockSpec((H, 1), lambda i: (0, 0)),       # b2     (resident)
            pl.BlockSpec((H, 1), lambda i: (0, 0)),       # w3 col (resident)
            pl.BlockSpec(memory_space=pltpu.MemorySpace.SMEM),    # c0 scalar
        ],
        out_specs=pl.BlockSpec((1, tb), lambda i: (0, i)),
        compiler_params=pltpu.CompilerParams(
            dimension_semantics=("parallel",),            # megacore on v7x
        ),
        cost_estimate=cost,
    )(x, w1t, b1c, w2t, b2c, w3c, c0)

    return out[0, :B]


def init_params(key, state_dim, hidden):
    k1, k2, k3 = jax.random.split(key, 3)
    scale1 = 1.0 / jnp.sqrt(state_dim)
    scale2 = 1.0 / jnp.sqrt(hidden)
    return {
        "w1": jax.random.normal(k1, (state_dim, hidden), jnp.float32) * scale1,
        "b1": jnp.zeros((1, hidden), jnp.float32),
        "w2": jax.random.normal(k2, (hidden, hidden), jnp.float32) * scale2,
        "b2": jnp.zeros((1, hidden), jnp.float32),
        "w3": jax.random.normal(k3, (hidden, 1), jnp.float32) * scale2,
        "b3": jnp.zeros((1, 1), jnp.float32),
    }


def _reference_f32(states, s0, params):
    """Original module semantics in pure f32 (HIGHEST-precision matmuls)."""
    hi = jax.lax.Precision.HIGHEST

    def net(z):
        h1 = jnp.maximum(jnp.dot(z, params["w1"], precision=hi) + params["b1"], 0.0)
        h2 = jnp.maximum(jnp.dot(h1, params["w2"], precision=hi) + params["b2"], 0.0)
        return jnp.dot(h2, params["w3"], precision=hi) + params["b3"]

    sp = jnp.logaddexp(net(states) - net(s0.reshape(1, -1)), 0.0)
    env = jnp.sum(states * states, axis=-1, keepdims=True)
    return (sp * ELL_COEF + env * BARRIER_COEF - 1.0)[:, 0]


if __name__ == "__main__":
    B, D, H = 8, 32, 32
    key = jax.random.PRNGKey(0)
    k_states, k_s0, k_params = jax.random.split(key, 3)

    states = jax.random.normal(k_states, (B, D), jnp.float32)
    s0 = jax.random.normal(k_s0, (D,), jnp.float32)
    params = init_params(k_params, D, H)

    out = barrier_forward(states, s0, params)
    out = jax.block_until_ready(out)

    ref = _reference_f32(states, s0, params)

    assert out.shape == (B,)
    assert jnp.allclose(out, ref, atol=1e-3, rtol=1e-3), (out, ref)

    print("KERNEL_OK")
</pallas_src>

<mosaic_0001>
module attributes {stable_mosaic.version = 11 : i64} {
  func.func @_barrier_kernel(%arg0: i32, %arg1: memref<128x32xf32, #tpu.memory_space<vmem>>, %arg2: memref<32x32xf32, #tpu.memory_space<vmem>>, %arg3: memref<32x1xf32, #tpu.memory_space<vmem>>, %arg4: memref<32x32xf32, #tpu.memory_space<vmem>>, %arg5: memref<32x1xf32, #tpu.memory_space<vmem>>, %arg6: memref<32x1xf32, #tpu.memory_space<vmem>>, %arg7: memref<1x1xf32, #tpu.memory_space<smem>>, %arg8: memref<1x128xf32, #tpu.memory_space<vmem>>) attributes {dimension_semantics = [#tpu.dimension_semantics<parallel>], iteration_bounds = array<i64: 1>, scalar_prefetch = 0 : i64, scratch_operands = 0 : i64, tpu.core_type = #tpu.core_type<tc>, window_params = [{transform_indices = @transform_0, window_bounds = array<i64: 128, 32>}, {pipeline_mode = #tpu.pipeline_mode<synchronous>, transform_indices = @transform_1, window_bounds = array<i64: 32, 32>}, {pipeline_mode = #tpu.pipeline_mode<synchronous>, transform_indices = @transform_2, window_bounds = array<i64: 32, 1>}, {pipeline_mode = #tpu.pipeline_mode<synchronous>, transform_indices = @transform_3, window_bounds = array<i64: 32, 32>}, {pipeline_mode = #tpu.pipeline_mode<synchronous>, transform_indices = @transform_4, window_bounds = array<i64: 32, 1>}, {pipeline_mode = #tpu.pipeline_mode<synchronous>, transform_indices = @transform_5, window_bounds = array<i64: 32, 1>}, {transform_indices = @transform_6, window_bounds = array<i64: 1, 1>}, {transform_indices = @transform_7, window_bounds = array<i64: 1, 128>}]} {
    %c0 = arith.constant 0 : index
    %c0_0 = arith.constant 0 : index
    %0 = vector.load %arg1[%c0, %c0_0] : memref<128x32xf32, #tpu.memory_space<vmem>>, vector<128x32xf32>
    %1 = tpu.transpose %0, [1, 0] : vector<128x32xf32> -> vector<32x128xf32>
    %c0_1 = arith.constant 0 : index
    %c0_2 = arith.constant 0 : index
    %2 = vector.load %arg2[%c0_1, %c0_2] : memref<32x32xf32, #tpu.memory_space<vmem>>, vector<32x32xf32>
    %cst = arith.constant dense<0.000000e+00> : vector<32x128xf32>
    %3 = tpu.matmul %2, %1, %cst {dimension_numbers = #tpu.dot_dimension_numbers<[1], [0], [0], [1], [0, 0, 1, 1], [], []>} : vector<32x32xf32>, vector<32x128xf32>, vector<32x128xf32> -> vector<32x128xf32>
    %c0_3 = arith.constant 0 : index
    %c0_4 = arith.constant 0 : index
    %4 = vector.load %arg3[%c0_3, %c0_4] : memref<32x1xf32, #tpu.memory_space<vmem>>, vector<32x1xf32>
    %5 = vector.broadcast %4 : vector<32x1xf32> to vector<32x128xf32>
    %6 = arith.addf %3, %5 : vector<32x128xf32>
    %cst_5 = arith.constant 0.000000e+00 : f32
    %7 = vector.broadcast %cst_5 : f32 to vector<32x128xf32>
    %8 = arith.maximumf %6, %7 : vector<32x128xf32>
    %c0_6 = arith.constant 0 : index
    %c0_7 = arith.constant 0 : index
    %9 = vector.load %arg4[%c0_6, %c0_7] : memref<32x32xf32, #tpu.memory_space<vmem>>, vector<32x32xf32>
    %cst_8 = arith.constant dense<0.000000e+00> : vector<32x128xf32>
    %10 = tpu.matmul %9, %8, %cst_8 {dimension_numbers = #tpu.dot_dimension_numbers<[1], [0], [0], [1], [0, 0, 1, 1], [], []>} : vector<32x32xf32>, vector<32x128xf32>, vector<32x128xf32> -> vector<32x128xf32>
    %c0_9 = arith.constant 0 : index
    %c0_10 = arith.constant 0 : index
    %11 = vector.load %arg5[%c0_9, %c0_10] : memref<32x1xf32, #tpu.memory_space<vmem>>, vector<32x1xf32>
    %12 = vector.broadcast %11 : vector<32x1xf32> to vector<32x128xf32>
    %13 = arith.addf %10, %12 : vector<32x128xf32>
    %cst_11 = arith.constant 0.000000e+00 : f32
    %14 = vector.broadcast %cst_11 : f32 to vector<32x128xf32>
    %15 = arith.maximumf %13, %14 : vector<32x128xf32>
    %c0_12 = arith.constant 0 : index
    %c0_13 = arith.constant 0 : index
    %16 = vector.load %arg6[%c0_12, %c0_13] : memref<32x1xf32, #tpu.memory_space<vmem>>, vector<32x1xf32>
    %17 = vector.broadcast %16 : vector<32x1xf32> to vector<32x128xf32>
    %18 = arith.mulf %15, %17 : vector<32x128xf32>
    %cst_14 = arith.constant dense<0.000000e+00> : vector<128xf32>
    %19 = vector.multi_reduction <add>, %18, %cst_14 [0] : vector<32x128xf32> to vector<128xf32>
    %20 = vector.shape_cast %19 : vector<128xf32> to vector<1x128xf32>
    %c0_15 = arith.constant 0 : index
    %c0_16 = arith.constant 0 : index
    %21 = memref.load %arg7[%c0_15, %c0_16] : memref<1x1xf32, #tpu.memory_space<smem>>
    %22 = vector.broadcast %21 : f32 to vector<1x128xf32>
    %23 = arith.addf %20, %22 : vector<1x128xf32>
    %cst_17 = arith.constant 0.000000e+00 : f32
    %24 = vector.broadcast %cst_17 : f32 to vector<1x128xf32>
    %25 = arith.maximumf %23, %24 : vector<1x128xf32>
    %26 = vector.broadcast %cst_17 : f32 to vector<1x128xf32>
    %27 = arith.subf %23, %26 : vector<1x128xf32>
    %28 = arith.cmpf one, %27, %27 : vector<1x128xf32>
    %29 = vector.broadcast %cst_17 : f32 to vector<1x128xf32>
    %30 = arith.addf %23, %29 : vector<1x128xf32>
    %31 = math.absf %27 : vector<1x128xf32>
    %cst_18 = arith.constant 0.000000e+00 : f32
    %32 = vector.broadcast %cst_18 : f32 to vector<1x128xf32>
    %33 = arith.subf %32, %31 : vector<1x128xf32>
    %34 = math.exp %33 : vector<1x128xf32>
    %35 = math.log1p %34 : vector<1x128xf32>
    %36 = arith.addf %25, %35 : vector<1x128xf32>
    %37 = arith.select %28, %30, %36 : vector<1x128xi1>, vector<1x128xf32>
    %38 = arith.mulf %1, %1 : vector<32x128xf32>
    %cst_19 = arith.constant dense<0.000000e+00> : vector<128xf32>
    %39 = vector.multi_reduction <add>, %38, %cst_19 [0] : vector<32x128xf32> to vector<128xf32>
    %40 = vector.shape_cast %39 : vector<128xf32> to vector<1x128xf32>
    %cst_20 = arith.constant 1.000000e+00 : f32
    %41 = vector.broadcast %cst_20 : f32 to vector<1x128xf32>
    %42 = arith.mulf %37, %41 : vector<1x128xf32>
    %cst_21 = arith.constant 0.00999999977 : f32
    %43 = vector.broadcast %cst_21 : f32 to vector<1x128xf32>
    %44 = arith.mulf %40, %43 : vector<1x128xf32>
    %45 = arith.addf %42, %44 : vector<1x128xf32>
    %cst_22 = arith.constant 1.000000e+00 : f32
    %46 = vector.broadcast %cst_22 : f32 to vector<1x128xf32>
    %47 = arith.subf %45, %46 : vector<1x128xf32>
    %c0_23 = arith.constant 0 : index
    %c0_24 = arith.constant 0 : index
    %48 = vector.load %arg8[%c0_23, %c0_24] : memref<1x128xf32, #tpu.memory_space<vmem>>, vector<1x128xf32>
    tpu.vector_store %arg8[%c0_23, %c0_24], %47 {strides = array<i32>} : memref<1x128xf32, #tpu.memory_space<vmem>>, vector<1x128xf32>,
    return
  }
  func.func @transform_0(%arg0: i32) -> (i32, i32) {
    %c0_i32 = arith.constant 0 : i32
    %c0_i32_0 = arith.constant 0 : i32
    return %arg0, %c0_i32 : i32, i32
  }
  func.func @transform_1(%arg0: i32) -> (i32, i32) {
    %c0_i32 = arith.constant 0 : i32
    %c0_i32_0 = arith.constant 0 : i32
    %c0_i32_1 = arith.constant 0 : i32
    return %c0_i32, %c0_i32_0 : i32, i32
  }
  func.func @transform_2(%arg0: i32) -> (i32, i32) {
    %c0_i32 = arith.constant 0 : i32
    %c0_i32_0 = arith.constant 0 : i32
    %c0_i32_1 = arith.constant 0 : i32
    return %c0_i32, %c0_i32_0 : i32, i32
  }
  func.func @transform_3(%arg0: i32) -> (i32, i32) {
    %c0_i32 = arith.constant 0 : i32
    %c0_i32_0 = arith.constant 0 : i32
    %c0_i32_1 = arith.constant 0 : i32
    return %c0_i32, %c0_i32_0 : i32, i32
  }
  func.func @transform_4(%arg0: i32) -> (i32, i32) {
    %c0_i32 = arith.constant 0 : i32
    %c0_i32_0 = arith.constant 0 : i32
    %c0_i32_1 = arith.constant 0 : i32
    return %c0_i32, %c0_i32_0 : i32, i32
  }
  func.func @transform_5(%arg0: i32) -> (i32, i32) {
    %c0_i32 = arith.constant 0 : i32
    %c0_i32_0 = arith.constant 0 : i32
    %c0_i32_1 = arith.constant 0 : i32
    return %c0_i32, %c0_i32_0 : i32, i32
  }
  func.func @transform_6(%arg0: i32) -> (i32, i32) {
    %c0_i32 = arith.constant 0 : i32
    %c0_i32_0 = arith.constant 0 : i32
    %c0_i32_1 = arith.constant 0 : i32
    return %c0_i32, %c0_i32_0 : i32, i32
  }
  func.func @transform_7(%arg0: i32) -> (i32, i32) {
    %c0_i32 = arith.constant 0 : i32
    %c0_i32_0 = arith.constant 0 : i32
    return %c0_i32, %arg0 : i32, i32
  }
}

</mosaic_0001>

<llo_original>
// kernel: barrier_forward.1
$region0: #{barrier_forward.1}
  #allocation0 [shape = 'u32[]', space=smem, size = 0x4, offset = 0x4, fixed_abs, tag = 'smem constant byte address 0x4 - core index']
  #allocation1 [shape = 'u32[72,128]{1,0:T(1,128)}', space=vmem, size = 0x9000, scoped, tag = 'internal scratch']
  #allocation2 [shape = 'f32[1,1]{1,0:T(1,128)S(6)}', space=smem, size = 0x200, scoped, tag = 'scoped memory for barrier_forward.1']
  %s0 = inlined_call_operand.vmem [shape: f32[128,32], index: 0, kind: input, shape index: {}]
  %s1 = inlined_call_operand.vmem [shape: f32[32,32], index: 1, kind: input, shape index: {}]
  %s2 = inlined_call_operand.vmem [shape: f32[32,1], index: 2, kind: input, shape index: {}]
  %s3 = inlined_call_operand.vmem [shape: f32[32,32], index: 3, kind: input, shape index: {}]
  %s4 = inlined_call_operand.vmem [shape: f32[32,1], index: 4, kind: input, shape index: {}]
  %s5 = inlined_call_operand.vmem [shape: f32[32,1], index: 5, kind: input, shape index: {}]
  %s6 = inlined_call_operand.<no memory space> [shape: f32[1,1], index: 6, kind: input, shape index: {}]
  %s7 = inlined_call_operand.vmem [shape: f32[1,128], index: 7, kind: output, shape index: {}]
  %s8 = sld [smem:[#allocation0]]
  $region38: #{barrier_forward.1} parent=0
    _
  %s10 = ssub.s32 1, %s8
  %s11 = scalar_select 0, %s10, %s8
  %12 = sst [smem:[#allocation2]] %s6
  // Predicated region
  $region2: #{barrier_forward.1} parent=0 // pred_check
    _
  $region3: #{barrier_forward.1} parent=0 // pred_check_branch
    %14 = sbr.rel (0) target = $region5
  $region4: #{barrier_forward.1} parent=0 // pred_region
    _
  $region5: #{barrier_forward.1} parent=0 // pred_fallthru
    _
  // Predicated region
  $region6: #{barrier_forward.1} parent=0 // pred_check
    _
  $region7: #{barrier_forward.1} parent=0 // pred_check_branch
    %16 = sbr.rel (0) target = $region9
  $region8: #{barrier_forward.1} parent=0 // pred_region
    _
  $region9: #{barrier_forward.1} parent=0 // pred_fallthru
    _
  // Predicated region
  $region10: #{barrier_forward.1} parent=0 // pred_check
    _
  $region11: #{barrier_forward.1} parent=0 // pred_check_branch
    %18 = sbr.rel (0) target = $region13
  $region12: #{barrier_forward.1} parent=0 // pred_region
    _
  $region13: #{barrier_forward.1} parent=0 // pred_fallthru
    _
  // Predicated region
  $region14: #{barrier_forward.1} parent=0 // pred_check
    _
  $region15: #{barrier_forward.1} parent=0 // pred_check_branch
    %20 = sbr.rel (0) target = $region17
  $region16: #{barrier_forward.1} parent=0 // pred_region
    _
  $region17: #{barrier_forward.1} parent=0 // pred_fallthru
    _
  // Predicated region
  $region18: #{barrier_forward.1} parent=0 // pred_check
    _
  $region19: #{barrier_forward.1} parent=0 // pred_check_branch
    %22 = sbr.rel (0) target = $region21
  $region20: #{barrier_forward.1} parent=0 // pred_region
    _
  $region21: #{barrier_forward.1} parent=0 // pred_fallthru
    _
  // Predicated region
  $region22: #{barrier_forward.1} parent=0 // pred_check
    _
  $region23: #{barrier_forward.1} parent=0 // pred_check_branch
    %24 = sbr.rel (0) target = $region25
  $region24: #{barrier_forward.1} parent=0 // pred_region
    _
  $region25: #{barrier_forward.1} parent=0 // pred_fallthru
    _
  // Predicated region
  $region26: #{barrier_forward.1} parent=0 // pred_check
    _
  $region27: #{barrier_forward.1} parent=0 // pred_check_branch
    %26 = sbr.rel (0) target = $region29
  $region28: #{barrier_forward.1} parent=0 // pred_region
    _
  $region29: #{barrier_forward.1} parent=0 // pred_fallthru
    _
  %v27 = vld [vmem:[%s0] sm:$0xff]
  %v28 = vld [vmem:[%s0 + $0x8] sm:$0xff]
  %v29 = vld [vmem:[%s0 + $0x10] sm:$0xff]
  %v30 = vld [vmem:[%s0 + $0x18] sm:$0xff]
  %v31 = vld [vmem:[%s0 + $0x20] sm:$0xff]
  %v32 = vld [vmem:[%s0 + $0x28] sm:$0xff]
  %v33 = vld [vmem:[%s0 + $0x30] sm:$0xff]
  %v34 = vld [vmem:[%s0 + $0x38] sm:$0xff]
  %v35 = vld [vmem:[%s0 + $0x40] sm:$0xff]
  %v36 = vld [vmem:[%s0 + $0x48] sm:$0xff]
  %v37 = vld [vmem:[%s0 + $0x50] sm:$0xff]
  %v38 = vld [vmem:[%s0 + $0x58] sm:$0xff]
  %v39 = vld [vmem:[%s0 + $0x60] sm:$0xff]
  %v40 = vld [vmem:[%s0 + $0x68] sm:$0xff]
  %v41 = vld [vmem:[%s0 + $0x70] sm:$0xff]
  %v42 = vld [vmem:[%s0 + $0x78] sm:$0xff]
  %43 = vxpose.xlu0.b32.start [1/16] %v27, 128
  %44 = vxpose.xlu0.b32.cont [2/16] %v28, 128
  %45 = vxpose.xlu0.b32.cont [3/16] %v29, 128
  %46 = vxpose.xlu0.b32.cont [4/16] %v30, 128
  %47 = vxpose.xlu0.b32.cont [5/16] %v31, 128
  %48 = vxpose.xlu0.b32.cont [6/16] %v32, 128
  %49 = vxpose.xlu0.b32.cont [7/16] %v33, 128
  %50 = vxpose.xlu0.b32.cont [8/16] %v34, 128
  %51 = vxpose.xlu0.b32.cont [9/16] %v35, 128
  %52 = vxpose.xlu0.b32.cont [10/16] %v36, 128
  %53 = vxpose.xlu0.b32.cont [11/16] %v37, 128
  %54 = vxpose.xlu0.b32.cont [12/16] %v38, 128
  %55 = vxpose.xlu0.b32.cont [13/16] %v39, 128
  %56 = vxpose.xlu0.b32.cont [14/16] %v40, 128
  %57 = vxpose.xlu0.b32.cont [15/16] %v41, 128
  %58 = vxpose.xlu0.b32.end [16/16] %v42, 128
  %v59 = vpop.trf.xlu0
  %v60 = vpop.trf.xlu0
  %v61 = vpop.trf.xlu0
  %v62 = vpop.trf.xlu0
  %v63 = vpop.trf.xlu0
  %v64 = vpop.trf.xlu0
  %v65 = vpop.trf.xlu0
  %v66 = vpop.trf.xlu0
  %v67 = vpop.trf.xlu0
  %v68 = vpop.trf.xlu0
  %v69 = vpop.trf.xlu0
  %v70 = vpop.trf.xlu0
  %v71 = vpop.trf.xlu0
  %v72 = vpop.trf.xlu0
  %v73 = vpop.trf.xlu0
  %v74 = vpop.trf.xlu0
  %v75 = vld [vmem:[%s1] sm:$0xff]
  %v76 = vld [vmem:[%s1 + $0x8] sm:$0xff]
  %v77 = vld [vmem:[%s1 + $0x10] sm:$0xff]
  %v78 = vld [vmem:[%s1 + $0x18] sm:$0xff]
  %v79 = vld [vmem:[%s2] sm:$0xff]
  %v80 = vld [vmem:[%s2 + $0x8] sm:$0xff]
  %v81 = vld [vmem:[%s2 + $0x10] sm:$0xff]
  %v82 = vld [vmem:[%s2 + $0x18] sm:$0xff]
  %84 = vset.pattern.permute.xlu0 0
  %85 = vperm.xlu0 %84, %v79
  %v86 = vpop.permute.xlu0 %85
  %89 = vset.pattern.permute.xlu0 0
  %90 = vperm.xlu0 %89, %v80
  %v91 = vpop.permute.xlu0 %90
  %94 = vset.pattern.permute.xlu0 0
  %95 = vperm.xlu0 %94, %v81
  %v96 = vpop.permute.xlu0 %95
  %99 = vset.pattern.permute.xlu0 0
  %100 = vperm.xlu0 %99, %v82
  %v101 = vpop.permute.xlu0 %100
  %vm103 = vcmask 261120
  %v105 = vsel %vm103, %v75, 0
  %v108 = vsel %vm103, %v76, 0
  %v111 = vsel %vm103, %v77, 0
  %v114 = vsel %vm103, %v78, 0
  %116 = vmatpush.msra.mxu0 0.0
  %117 = vmatpush.msra.mxu0 0.0
  %118 = vmatpush.msra.mxu0 0.0
  %119 = vmatpush.msra.mxu0 0.0
  %120 = vmatpush.msra.mxu0 0.0
  %121 = vmatpush.msra.mxu0 0.0
  %122 = vmatpush.msra.mxu0 0.0
  %123 = vmatpush.msra.mxu0 0.0
  %124 = vmatpush.msra.mxu0 0.0
  %125 = vmatpush.msra.mxu0 0.0
  %126 = vmatpush.msra.mxu0 0.0
  %127 = vmatpush.msra.mxu0 0.0
  %128 = vmatpush.msra.mxu0 %v62
  %129 = vmatpush.msra.mxu0 %v61
  %130 = vmatpush.msra.mxu0 %v60
  %131 = vmatpush.msra.mxu0 %v59
  %132 = vmatmul.f32.gmra.mxu0 %v105
  %v133 = vpop.f32.mrf.mxu0
  %v134 = vadd.f32 %v86, %v133
  %135 = vmatmul.f32.gmra.mxu0 %v108
  %v136 = vpop.f32.mrf.mxu0
  %v137 = vadd.f32 %v91, %v136
  %138 = vmatmul.f32.gmra.mxu0 %v111
  %v139 = vpop.f32.mrf.mxu0
  %v140 = vadd.f32 %v96, %v139
  %141 = vmatmul.f32.gmra.mxu0 %v114
  %v142 = vpop.f32.mrf.mxu0
  %v143 = vadd.f32 %v101, %v142
  %144 = vdwg.mxu0
  %v145 = vmax.f32 %v134, 0.0
  %v146 = vmax.f32 %v137, 0.0
  %v147 = vmax.f32 %v140, 0.0
  %v148 = vmax.f32 %v143, 0.0
  %v149 = vld [vmem:[%s3] sm:$0xff]
  %v150 = vld [vmem:[%s3 + $0x8] sm:$0xff]
  %v151 = vld [vmem:[%s3 + $0x10] sm:$0xff]
  %v152 = vld [vmem:[%s3 + $0x18] sm:$0xff]
  %v153 = vld [vmem:[%s4] sm:$0xff]
  %v154 = vld [vmem:[%s4 + $0x8] sm:$0xff]
  %v155 = vld [vmem:[%s4 + $0x10] sm:$0xff]
  %v156 = vld [vmem:[%s4 + $0x18] sm:$0xff]
  %158 = vset.pattern.permute.xlu0 0
  %159 = vperm.xlu0 %158, %v153
  %v160 = vpop.permute.xlu0 %159
  %163 = vset.pattern.permute.xlu0 0
  %164 = vperm.xlu0 %163, %v154
  %v165 = vpop.permute.xlu0 %164
  %168 = vset.pattern.permute.xlu0 0
  %169 = vperm.xlu0 %168, %v155
  %v170 = vpop.permute.xlu0 %169
  %173 = vset.pattern.permute.xlu0 0
  %174 = vperm.xlu0 %173, %v156
  %v175 = vpop.permute.xlu0 %174
  %v178 = vsel %vm103, %v149, 0
  %v181 = vsel %vm103, %v150, 0
  %v184 = vsel %vm103, %v151, 0
  %v187 = vsel %vm103, %v152, 0
  %189 = vmatpush.msra.mxu0 0.0
  %190 = vmatpush.msra.mxu0 0.0
  %191 = vmatpush.msra.mxu0 0.0
  %192 = vmatpush.msra.mxu0 0.0
  %193 = vmatpush.msra.mxu0 0.0
  %194 = vmatpush.msra.mxu0 0.0
  %195 = vmatpush.msra.mxu0 0.0
  %196 = vmatpush.msra.mxu0 0.0
  %197 = vmatpush.msra.mxu0 0.0
  %198 = vmatpush.msra.mxu0 0.0
  %199 = vmatpush.msra.mxu0 0.0
  %200 = vmatpush.msra.mxu0 0.0
  %201 = vmatpush.msra.mxu0 %v148
  %202 = vmatpush.msra.mxu0 %v147
  %203 = vmatpush.msra.mxu0 %v146
  %204 = vmatpush.msra.mxu0 %v145
  %205 = vmatmul.f32.gmra.mxu0 %v178
  %v206 = vpop.f32.mrf.mxu0
  %v207 = vadd.f32 %v160, %v206
  %208 = vmatmul.f32.gmra.mxu0 %v181
  %v209 = vpop.f32.mrf.mxu0
  %v210 = vadd.f32 %v165, %v209
  %211 = vmatmul.f32.gmra.mxu0 %v184
  %v212 = vpop.f32.mrf.mxu0
  %v213 = vadd.f32 %v170, %v212
  %214 = vmatmul.f32.gmra.mxu0 %v187
  %v215 = vpop.f32.mrf.mxu0
  %v216 = vadd.f32 %v175, %v215
  %217 = vdwg.mxu0
  %v218 = vmax.f32 %v207, 0.0
  %v219 = vmax.f32 %v210, 0.0
  %v220 = vmax.f32 %v213, 0.0
  %v221 = vmax.f32 %v216, 0.0
  %v222 = vld [vmem:[%s5] sm:$0xff]
  %v223 = vld [vmem:[%s5 + $0x8] sm:$0xff]
  %v224 = vld [vmem:[%s5 + $0x10] sm:$0xff]
  %v225 = vld [vmem:[%s5 + $0x18] sm:$0xff]
  %227 = vset.pattern.permute.xlu0 0
  %228 = vperm.xlu0 %227, %v222
  %v229 = vpop.permute.xlu0 %228
  %232 = vset.pattern.permute.xlu0 0
  %233 = vperm.xlu0 %232, %v223
  %v234 = vpop.permute.xlu0 %233
  %237 = vset.pattern.permute.xlu0 0
  %238 = vperm.xlu0 %237, %v224
  %v239 = vpop.permute.xlu0 %238
  %242 = vset.pattern.permute.xlu0 0
  %243 = vperm.xlu0 %242, %v225
  %v244 = vpop.permute.xlu0 %243
  %v246 = vmul.f32 %v218, %v229
  %v247 = vmul.f32 %v219, %v234
  %v248 = vmul.f32 %v220, %v239
  %v249 = vmul.f32 %v221, %v244
  %v250 = vadd.f32 %v246, %v247
  %v251 = vadd.f32 %v250, %v248
  %v252 = vadd.f32 %v251, %v249
  %v253 = vrot.slane %v252, 4
  %v254 = vadd.f32 %v252, %v253
  %v255 = vrot.slane %v254, 2
  %v256 = vadd.f32 %v254, %v255
  %v257 = vrot.slane %v256, 1
  %v258 = vadd.f32 %v256, %v257
  %s259 = sld [smem:[#allocation2]]
  %v260 = vstv %s259
  %v261 = vadd.f32 %v258, %v260
  %v262 = vmax.f32 %v261, 0.0
  %vm263 = vcmp.ne.f32.partialorder %v261, %v261
  %v264 = vadd.f32 %v261, 0.0
  %v265 = vand.u32 2147483647, %v261
  %v266 = vsub.f32 0.0, %v265
  %v267 = vmul.f32 %v266, 1.442695
  %v268 = vpow.pop %v267
  %v269 = vadd.f32 %v268, 1.0
  %v270 = vlog2.pop %v269
  %v271 = vmul.f32 %v270, 0.6931472
  %v272 = vmul.f32 -0.5, %v268
  %v273 = vadd.f32 %v272, 1.0
  %v274 = vmul.f32 %v273, %v268
  %v275 = vand.u32 2147483647, %v268
  %vm276 = vcmp.lt.f32.partialorder %v275, 0.0004427343
  %v277 = vsel %vm276, %v274, %v271
  %v278 = vadd.f32 %v262, %v277
  %v279 = vsel %vm263, %v264, %v278
  %v280 = vmul.f32 %v59, %v59
  %v281 = vmul.f32 %v60, %v60
  %v282 = vmul.f32 %v61, %v61
  %v283 = vmul.f32 %v62, %v62
  %v284 = vadd.f32 %v280, %v281
  %v285 = vadd.f32 %v284, %v282
  %v286 = vadd.f32 %v285, %v283
  %v287 = vrot.slane %v286, 4
  %v288 = vadd.f32 %v286, %v287
  %v289 = vrot.slane %v288, 2
  %v290 = vadd.f32 %v288, %v289
  %v291 = vrot.slane %v290, 1
  %v292 = vadd.f32 %v290, %v291
  %v293 = vmul.f32 %v292, 0.01
  %v294 = vadd.f32 %v279, %v293
  %v295 = vsub.f32 %v294, 1.0
  %296 = vst [vmem:[%s7] sm:$0x1] %v295
  // Predicated region
  $region30: #{barrier_forward.1} parent=0 // pred_check
    _
  $region31: #{barrier_forward.1} parent=0 // pred_check_branch
    %298 = sbr.rel (0) target = $region33
  $region32: #{barrier_forward.1} parent=0 // pred_region
    _
  $region33: #{barrier_forward.1} parent=0 // pred_fallthru
    _
  // Predicated region
  $region34: #{barrier_forward.1} parent=0 // pred_check
    _
  $region35: #{barrier_forward.1} parent=0 // pred_check_branch
    %300 = sbr.rel (0) target = $region37
  $region36: #{barrier_forward.1} parent=0 // pred_region
    _
  $region37: #{barrier_forward.1} parent=0 // pred_fallthru
    _

</llo_original>
